<compile_context>
chip_gen: v5e
topology: v5e:2x2
jax: 0.10.0
libtpu: 0.0.40
codegen_flags: <defaults>
</compile_context>

<pallas_src>
import math

import jax
import jax.numpy as jnp
from jax.experimental import pallas as pl
from jax.experimental.pallas import tpu as pltpu

# ---- shapes consistent with the module (small test config) ----
B = 2          # batch
S = 16         # seq_length
D = 32         # d_model
H = 2          # nhead
DH = D // H    # head dim
DFF = 64       # dim_feedforward
BS = B * S
EPS = 1e-5
LANES = 128
NEG = -1e30    # additive mask for cross-batch attention blocks


# ---------------------------------------------------------------------------
# Packed-parameter layout: every parameter is a row block of a single
# (TOTAL_ROWS, 128) f32 array.  Row offsets are multiples of 8 so static ref
# views never straddle (8, 128) tile boundaries; all blocks start at lane 0.
# ---------------------------------------------------------------------------
def _round8(n):
    return ((n + 7) // 8) * 8


_ENTRIES = [
    ("w_emb", 1, D),            # Linear(1, D) weight, stored as (1, D)
    ("posb", BS, D),            # (pos_embedding + emb bias), tiled over batch
    ("mask", BS, BS),           # additive cross-batch mask (0 / -1e30)
    ("wq0", D, DH), ("wq1", D, DH),     # per-head Q weights (scale folded in)
    ("wk0", D, DH), ("wk1", D, DH),
    ("wv0", D, DH), ("wv1", D, DH),
    ("wo0", DH, D), ("wo1", DH, D),     # per-head rows of the out projection
    ("bq0", 1, DH), ("bq1", 1, DH),
    ("bk0", 1, DH), ("bk1", 1, DH),
    ("bv0", 1, DH), ("bv1", 1, DH),
    ("bo", 1, D),
    ("ln1_g", 1, D), ("ln1_b", 1, D),
    ("w1", D, DFF), ("b1", 1, DFF),
    ("w2", DFF, D), ("b2", 1, D),
    ("ln2_g", 1, D), ("ln2_b", 1, D),
]


def _build_layout(entries):
    layout, off = {}, 0
    for name, rows, cols in entries:
        layout[name] = (off, rows, cols)
        off += _round8(rows)
    return layout, off


LAYOUT, TOTAL_ROWS = _build_layout(_ENTRIES)


# ---------------------------------------------------------------------------
# Kernel
# ---------------------------------------------------------------------------
def _layer_norm(h, gamma, beta):
    mu = jnp.mean(h, axis=-1, keepdims=True)
    c = h - mu
    var = jnp.mean(c * c, axis=-1, keepdims=True)
    return c * jax.lax.rsqrt(var + EPS) * gamma + beta


def betti_kernel(x_ref, p_ref, out_ref):
    def g(name):
        off, rows, cols = LAYOUT[name]
        return p_ref[off:off + rows, 0:cols]      # static ref view -> load

    # ---- input embedding + positional embedding (bias pre-folded) ----
    x = x_ref[...]                                # (BS, 1)
    h = x * g("w_emb") + g("posb")                # (BS, D)

    mask = g("mask")                              # (BS, BS) additive, 0 / -1e30

    # ---- multi-head self attention: heads fully unrolled, no lane slicing ----
    def attn_head(wq, wk, wv, wo, bq, bk, bv):
        q = jnp.dot(h, g(wq), preferred_element_type=jnp.float32) + g(bq)   # (BS, DH)
        k = jnp.dot(h, g(wk), preferred_element_type=jnp.float32) + g(bk)
        v = jnp.dot(h, g(wv), preferred_element_type=jnp.float32) + g(bv)
        # scores over the stacked batch; dot_general contracts last dims
        s = jax.lax.dot_general(q, k, (((1,), (1,)), ((), ())),
                                preferred_element_type=jnp.float32) + mask   # (BS, BS)
        s = s - jnp.max(s, axis=-1, keepdims=True)
        p = jnp.exp(s)
        p = p * pl.reciprocal(jnp.sum(p, axis=-1, keepdims=True), approx=True)
        o = jnp.dot(p, v, preferred_element_type=jnp.float32)               # (BS, DH)
        # per-head slice of the output projection (pre-split at prep time)
        return jnp.dot(o, g(wo), preferred_element_type=jnp.float32)        # (BS, D)

    attn = (attn_head("wq0", "wk0", "wv0", "wo0", "bq0", "bk0", "bv0")
            + attn_head("wq1", "wk1", "wv1", "wo1", "bq1", "bk1", "bv1")
            + g("bo"))

    # ---- residual + LayerNorm1 ----
    h1 = _layer_norm(h + attn, g("ln1_g"), g("ln1_b"))

    # ---- feed-forward (relu) ----
    f = jnp.dot(h1, g("w1"), preferred_element_type=jnp.float32) + g("b1")
    f = jnp.maximum(f, 0.0)
    f = jnp.dot(f, g("w2"), preferred_element_type=jnp.float32) + g("b2")

    # ---- residual + LayerNorm2 ----
    out_ref[...] = _layer_norm(h1 + f, g("ln2_g"), g("ln2_b"))


# ---------------------------------------------------------------------------
# Wrapper
# ---------------------------------------------------------------------------
def betti_encoder(x, packed):
    """x: (B, S) f32, packed: (TOTAL_ROWS, 128) f32 -> (B, S, D) f32."""
    x2 = x.reshape(BS, 1).astype(jnp.float32)
    out = pl.pallas_call(
        betti_kernel,
        out_shape=jax.ShapeDtypeStruct((BS, D), jnp.float32),
        in_specs=[pl.BlockSpec(memory_space=pltpu.MemorySpace.VMEM),
                  pl.BlockSpec(memory_space=pltpu.MemorySpace.VMEM)],
        out_specs=pl.BlockSpec(memory_space=pltpu.MemorySpace.VMEM),
    )(x2, packed)
    return out.reshape(B, S, D)


# ---------------------------------------------------------------------------
# Parameters (natural / PyTorch-like layout) and one-time prep into the
# packed layout.  Prep runs ONCE, outside the kernel call path.
# ---------------------------------------------------------------------------
def init_params(key):
    ks = jax.random.split(key, 16)
    scale = 0.05
    return {
        # Linear(1, D): torch weight (D,1), bias (D,) -> stored transposed (1, D)
        "w_emb": scale * jax.random.normal(ks[0], (1, D), jnp.float32),
        "b_emb": scale * jax.random.normal(ks[1], (1, D), jnp.float32),
        # positional embedding (1, S, D) -> (S, D)
        "pos": jax.random.normal(ks[2], (S, D), jnp.float32),
        # MHA in_proj (3D, D) / out_proj (D, D), stored transposed for h @ W
        "wqkv": scale * jax.random.normal(ks[3], (D, 3 * D), jnp.float32),
        "bqkv": scale * jax.random.normal(ks[4], (1, 3 * D), jnp.float32),
        "wo": scale * jax.random.normal(ks[5], (D, D), jnp.float32),
        "bo": scale * jax.random.normal(ks[6], (1, D), jnp.float32),
        # LayerNorm 1 / 2
        "ln1_g": jnp.ones((1, D), jnp.float32),
        "ln1_b": jnp.zeros((1, D), jnp.float32),
        "ln2_g": jnp.ones((1, D), jnp.float32),
        "ln2_b": jnp.zeros((1, D), jnp.float32),
        # FFN: linear1 (DFF, D) / linear2 (D, DFF), stored transposed
        "w1": scale * jax.random.normal(ks[7], (D, DFF), jnp.float32),
        "b1": scale * jax.random.normal(ks[8], (1, DFF), jnp.float32),
        "w2": scale * jax.random.normal(ks[9], (DFF, D), jnp.float32),
        "b2": scale * jax.random.normal(ks[10], (1, D), jnp.float32),
    }


def _batch_mask():
    bid = jnp.arange(BS) // S
    same = bid[:, None] == bid[None, :]
    return jnp.where(same, 0.0, NEG).astype(jnp.float32)


def prepare_params(p):
    """Pack all parameters into one (TOTAL_ROWS, 128) f32 array (prep-time)."""
    qscale = 1.0 / math.sqrt(DH)
    wqkv, bqkv = p["wqkv"], p["bqkv"]
    blocks = {
        "w_emb": p["w_emb"],
        "posb": jnp.tile(p["pos"] + p["b_emb"], (B, 1)),
        "mask": _batch_mask(),
        # per-head Q/K/V weights & biases; attention scale folded into Q
        "wq0": wqkv[:, 0:DH] * qscale,
        "wq1": wqkv[:, DH:D] * qscale,
        "wk0": wqkv[:, D:D + DH],
        "wk1": wqkv[:, D + DH:2 * D],
        "wv0": wqkv[:, 2 * D:2 * D + DH],
        "wv1": wqkv[:, 2 * D + DH:3 * D],
        "wo0": p["wo"][0:DH, :],
        "wo1": p["wo"][DH:D, :],
        "bq0": bqkv[:, 0:DH] * qscale,
        "bq1": bqkv[:, DH:D] * qscale,
        "bk0": bqkv[:, D:D + DH],
        "bk1": bqkv[:, D + DH:2 * D],
        "bv0": bqkv[:, 2 * D:2 * D + DH],
        "bv1": bqkv[:, 2 * D + DH:3 * D],
        "bo": p["bo"],
        "ln1_g": p["ln1_g"], "ln1_b": p["ln1_b"],
        "w1": p["w1"], "b1": p["b1"], "w2": p["w2"], "b2": p["b2"],
        "ln2_g": p["ln2_g"], "ln2_b": p["ln2_b"],
    }
    packed = jnp.zeros((TOTAL_ROWS, LANES), jnp.float32)
    for name, (off, rows, cols) in LAYOUT.items():
        val = blocks[name].astype(jnp.float32).reshape(rows, cols)
        packed = packed.at[off:off + rows, 0:cols].set(val)
    return packed


# ---------------------------------------------------------------------------
# Pure-JAX reference of the same (eval-mode) forward pass
# ---------------------------------------------------------------------------
def reference_forward(x, p):
    h = x[..., None] * p["w_emb"][None] + p["b_emb"][None] + p["pos"][None]
    qkv = jnp.einsum("bsd,de->bse", h, p["wqkv"]) + p["bqkv"][None]
    q, k, v = qkv[..., :D], qkv[..., D:2 * D], qkv[..., 2 * D:]
    outs = []
    for hh in range(H):
        sl = slice(hh * DH, (hh + 1) * DH)
        s = jnp.einsum("bqd,bkd->bqk", q[..., sl], k[..., sl]) / math.sqrt(DH)
        pmat = jax.nn.softmax(s, axis=-1)
        outs.append(jnp.einsum("bqk,bkd->bqd", pmat, v[..., sl]))
    attn = jnp.concatenate(outs, axis=-1)
    attn = jnp.einsum("bsd,de->bse", attn, p["wo"]) + p["bo"][None]
    h = h + attn
    mu = h.mean(-1, keepdims=True)
    var = ((h - mu) ** 2).mean(-1, keepdims=True)
    h = (h - mu) * jax.lax.rsqrt(var + EPS) * p["ln1_g"][None] + p["ln1_b"][None]
    f = jnp.maximum(jnp.einsum("bsd,df->bsf", h, p["w1"]) + p["b1"][None], 0.0)
    f = jnp.einsum("bsf,fd->bsd", f, p["w2"]) + p["b2"][None]
    h = h + f
    mu = h.mean(-1, keepdims=True)
    var = ((h - mu) ** 2).mean(-1, keepdims=True)
    return (h - mu) * jax.lax.rsqrt(var + EPS) * p["ln2_g"][None] + p["ln2_b"][None]


if __name__ == "__main__":
    key = jax.random.PRNGKey(0)
    kx, kp = jax.random.split(key)
    x = jax.random.normal(kx, (B, S), jnp.float32)
    params = init_params(kp)
    packed = jax.block_until_ready(prepare_params(params))   # one-time prep

    out = jax.block_until_ready(betti_encoder(x, packed))
    ref = jax.block_until_ready(reference_forward(x, params))

    assert out.shape == (B, S, D)
    assert bool(jnp.all(jnp.isfinite(out)))
    assert bool(jnp.allclose(out, ref, rtol=2e-3, atol=2e-3))
    # NOTE: dropout (p=0.1) is identity in eval mode; intentionally not applied.
    print("KERNEL_OK")
</pallas_src>

<mosaic_0001>
module attributes {stable_mosaic.version = 11 : i64} {
  func.func @betti_kernel(%arg0: memref<32x1xf32, #tpu.memory_space<vmem>>, %arg1: memref<496x128xf32, #tpu.memory_space<vmem>>, %arg2: memref<32x32xf32, #tpu.memory_space<vmem>>) attributes {dimension_semantics = [], scalar_prefetch = 0 : i64, scratch_operands = 0 : i64, tpu.core_type = #tpu.core_type<tc>} {
    %c0 = arith.constant 0 : index
    %c0_0 = arith.constant 0 : index
    %0 = vector.load %arg0[%c0, %c0_0] : memref<32x1xf32, #tpu.memory_space<vmem>>, vector<32x1xf32>
    %c0_1 = arith.constant 0 : index
    %c0_2 = arith.constant 0 : index
    %1 = vector.load %arg1[%c0_1, %c0_2] : memref<496x128xf32, #tpu.memory_space<vmem>>, vector<1x32xf32>
    %2 = vector.broadcast %0 : vector<32x1xf32> to vector<32x32xf32>
    %3 = vector.broadcast %1 : vector<1x32xf32> to vector<32x32xf32>
    %4 = arith.mulf %2, %3 : vector<32x32xf32>
    %c8 = arith.constant 8 : index
    %c0_3 = arith.constant 0 : index
    %5 = vector.load %arg1[%c8, %c0_3] : memref<496x128xf32, #tpu.memory_space<vmem>>, vector<32x32xf32>
    %6 = arith.addf %4, %5 : vector<32x32xf32>
    %c40 = arith.constant 40 : index
    %c0_4 = arith.constant 0 : index
    %7 = vector.load %arg1[%c40, %c0_4] : memref<496x128xf32, #tpu.memory_space<vmem>>, vector<32x32xf32>
    %c72 = arith.constant 72 : index
    %c0_5 = arith.constant 0 : index
    %8 = vector.load %arg1[%c72, %c0_5] : memref<496x128xf32, #tpu.memory_space<vmem>>, vector<32x16xf32>
    %cst = arith.constant dense<0.000000e+00> : vector<32x16xf32>
    %9 = tpu.matmul %6, %8, %cst {dimension_numbers = #tpu.dot_dimension_numbers<[1], [0], [0], [1], [0, 0, 1, 1], [], []>} : vector<32x32xf32>, vector<32x16xf32>, vector<32x16xf32> -> vector<32x16xf32>
    %c296 = arith.constant 296 : index
    %c0_6 = arith.constant 0 : index
    %10 = vector.load %arg1[%c296, %c0_6] : memref<496x128xf32, #tpu.memory_space<vmem>>, vector<1x16xf32>
    %11 = vector.broadcast %10 : vector<1x16xf32> to vector<32x16xf32>
    %12 = arith.addf %9, %11 : vector<32x16xf32>
    %c136 = arith.constant 136 : index
    %c0_7 = arith.constant 0 : index
    %13 = vector.load %arg1[%c136, %c0_7] : memref<496x128xf32, #tpu.memory_space<vmem>>, vector<32x16xf32>
    %cst_8 = arith.constant dense<0.000000e+00> : vector<32x16xf32>
    %14 = tpu.matmul %6, %13, %cst_8 {dimension_numbers = #tpu.dot_dimension_numbers<[1], [0], [0], [1], [0, 0, 1, 1], [], []>} : vector<32x32xf32>, vector<32x16xf32>, vector<32x16xf32> -> vector<32x16xf32>
    %c312 = arith.constant 312 : index
    %c0_9 = arith.constant 0 : index
    %15 = vector.load %arg1[%c312, %c0_9] : memref<496x128xf32, #tpu.memory_space<vmem>>, vector<1x16xf32>
    %16 = vector.broadcast %15 : vector<1x16xf32> to vector<32x16xf32>
    %17 = arith.addf %14, %16 : vector<32x16xf32>
    %c200 = arith.constant 200 : index
    %c0_10 = arith.constant 0 : index
    %18 = vector.load %arg1[%c200, %c0_10] : memref<496x128xf32, #tpu.memory_space<vmem>>, vector<32x16xf32>
    %cst_11 = arith.constant dense<0.000000e+00> : vector<32x16xf32>
    %19 = tpu.matmul %6, %18, %cst_11 {dimension_numbers = #tpu.dot_dimension_numbers<[1], [0], [0], [1], [0, 0, 1, 1], [], []>} : vector<32x32xf32>, vector<32x16xf32>, vector<32x16xf32> -> vector<32x16xf32>
    %c328 = arith.constant 328 : index
    %c0_12 = arith.constant 0 : index
    %20 = vector.load %arg1[%c328, %c0_12] : memref<496x128xf32, #tpu.memory_space<vmem>>, vector<1x16xf32>
    %21 = vector.broadcast %20 : vector<1x16xf32> to vector<32x16xf32>
    %22 = arith.addf %19, %21 : vector<32x16xf32>
    %cst_13 = arith.constant dense<0.000000e+00> : vector<32x32xf32>
    %23 = tpu.matmul %12, %17, %cst_13 {dimension_numbers = #tpu.dot_dimension_numbers<[1], [1], [0], [0], [0, 0, 1, 0], [], []>} : vector<32x16xf32>, vector<32x16xf32>, vector<32x32xf32> -> vector<32x32xf32>
    %24 = arith.addf %23, %7 : vector<32x32xf32>
    %cst_14 = arith.constant dense<0xFF800000> : vector<32xf32>
    %25 = vector.multi_reduction <maximumf>, %24, %cst_14 [1] : vector<32x32xf32> to vector<32xf32>
    %26 = vector.shape_cast %25 : vector<32xf32> to vector<32x1xf32>
    %27 = vector.broadcast %26 : vector<32x1xf32> to vector<32x32xf32>
    %28 = arith.subf %24, %27 : vector<32x32xf32>
    %29 = math.exp %28 : vector<32x32xf32>
    %cst_15 = arith.constant dense<0.000000e+00> : vector<32xf32>
    %30 = vector.multi_reduction <add>, %29, %cst_15 [1] : vector<32x32xf32> to vector<32xf32>
    %31 = vector.shape_cast %30 : vector<32xf32> to vector<32x1xf32>
    %32 = tpu.reciprocal %31 {approx = true} : vector<32x1xf32> -> vector<32x1xf32>
    %33 = vector.broadcast %32 : vector<32x1xf32> to vector<32x32xf32>
    %34 = arith.mulf %29, %33 : vector<32x32xf32>
    %cst_16 = arith.constant dense<0.000000e+00> : vector<32x16xf32>
    %35 = tpu.matmul %34, %22, %cst_16 {dimension_numbers = #tpu.dot_dimension_numbers<[1], [0], [0], [1], [0, 0, 1, 1], [], []>} : vector<32x32xf32>, vector<32x16xf32>, vector<32x16xf32> -> vector<32x16xf32>
    %c264 = arith.constant 264 : index
    %c0_17 = arith.constant 0 : index
    %36 = vector.load %arg1[%c264, %c0_17] : memref<496x128xf32, #tpu.memory_space<vmem>>, vector<16x32xf32>
    %cst_18 = arith.constant dense<0.000000e+00> : vector<32x32xf32>
    %37 = tpu.matmul %35, %36, %cst_18 {dimension_numbers = #tpu.dot_dimension_numbers<[1], [0], [0], [1], [0, 0, 1, 1], [], []>} : vector<32x16xf32>, vector<16x32xf32>, vector<32x32xf32> -> vector<32x32xf32>
    %c104 = arith.constant 104 : index
    %c0_19 = arith.constant 0 : index
    %38 = vector.load %arg1[%c104, %c0_19] : memref<496x128xf32, #tpu.memory_space<vmem>>, vector<32x16xf32>
    %cst_20 = arith.constant dense<0.000000e+00> : vector<32x16xf32>
    %39 = tpu.matmul %6, %38, %cst_20 {dimension_numbers = #tpu.dot_dimension_numbers<[1], [0], [0], [1], [0, 0, 1, 1], [], []>} : vector<32x32xf32>, vector<32x16xf32>, vector<32x16xf32> -> vector<32x16xf32>
    %c304 = arith.constant 304 : index
    %c0_21 = arith.constant 0 : index
    %40 = vector.load %arg1[%c304, %c0_21] : memref<496x128xf32, #tpu.memory_space<vmem>>, vector<1x16xf32>
    %41 = vector.broadcast %40 : vector<1x16xf32> to vector<32x16xf32>
    %42 = arith.addf %39, %41 : vector<32x16xf32>
    %c168 = arith.constant 168 : index
    %c0_22 = arith.constant 0 : index
    %43 = vector.load %arg1[%c168, %c0_22] : memref<496x128xf32, #tpu.memory_space<vmem>>, vector<32x16xf32>
    %cst_23 = arith.constant dense<0.000000e+00> : vector<32x16xf32>
    %44 = tpu.matmul %6, %43, %cst_23 {dimension_numbers = #tpu.dot_dimension_numbers<[1], [0], [0], [1], [0, 0, 1, 1], [], []>} : vector<32x32xf32>, vector<32x16xf32>, vector<32x16xf32> -> vector<32x16xf32>
    %c320 = arith.constant 320 : index
    %c0_24 = arith.constant 0 : index
    %45 = vector.load %arg1[%c320, %c0_24] : memref<496x128xf32, #tpu.memory_space<vmem>>, vector<1x16xf32>
    %46 = vector.broadcast %45 : vector<1x16xf32> to vector<32x16xf32>
    %47 = arith.addf %44, %46 : vector<32x16xf32>
    %c232 = arith.constant 232 : index
    %c0_25 = arith.constant 0 : index
    %48 = vector.load %arg1[%c232, %c0_25] : memref<496x128xf32, #tpu.memory_space<vmem>>, vector<32x16xf32>
    %cst_26 = arith.constant dense<0.000000e+00> : vector<32x16xf32>
    %49 = tpu.matmul %6, %48, %cst_26 {dimension_numbers = #tpu.dot_dimension_numbers<[1], [0], [0], [1], [0, 0, 1, 1], [], []>} : vector<32x32xf32>, vector<32x16xf32>, vector<32x16xf32> -> vector<32x16xf32>
    %c336 = arith.constant 336 : index
    %c0_27 = arith.constant 0 : index
    %50 = vector.load %arg1[%c336, %c0_27] : memref<496x128xf32, #tpu.memory_space<vmem>>, vector<1x16xf32>
    %51 = vector.broadcast %50 : vector<1x16xf32> to vector<32x16xf32>
    %52 = arith.addf %49, %51 : vector<32x16xf32>
    %cst_28 = arith.constant dense<0.000000e+00> : vector<32x32xf32>
    %53 = tpu.matmul %42, %47, %cst_28 {dimension_numbers = #tpu.dot_dimension_numbers<[1], [1], [0], [0], [0, 0, 1, 0], [], []>} : vector<32x16xf32>, vector<32x16xf32>, vector<32x32xf32> -> vector<32x32xf32>
    %54 = arith.addf %53, %7 : vector<32x32xf32>
    %cst_29 = arith.constant dense<0xFF800000> : vector<32xf32>
    %55 = vector.multi_reduction <maximumf>, %54, %cst_29 [1] : vector<32x32xf32> to vector<32xf32>
    %56 = vector.shape_cast %55 : vector<32xf32> to vector<32x1xf32>
    %57 = vector.broadcast %56 : vector<32x1xf32> to vector<32x32xf32>
    %58 = arith.subf %54, %57 : vector<32x32xf32>
    %59 = math.exp %58 : vector<32x32xf32>
    %cst_30 = arith.constant dense<0.000000e+00> : vector<32xf32>
    %60 = vector.multi_reduction <add>, %59, %cst_30 [1] : vector<32x32xf32> to vector<32xf32>
    %61 = vector.shape_cast %60 : vector<32xf32> to vector<32x1xf32>
    %62 = tpu.reciprocal %61 {approx = true} : vector<32x1xf32> -> vector<32x1xf32>
    %63 = vector.broadcast %62 : vector<32x1xf32> to vector<32x32xf32>
    %64 = arith.mulf %59, %63 : vector<32x32xf32>
    %cst_31 = arith.constant dense<0.000000e+00> : vector<32x16xf32>
    %65 = tpu.matmul %64, %52, %cst_31 {dimension_numbers = #tpu.dot_dimension_numbers<[1], [0], [0], [1], [0, 0, 1, 1], [], []>} : vector<32x32xf32>, vector<32x16xf32>, vector<32x16xf32> -> vector<32x16xf32>
    %c280 = arith.constant 280 : index
    %c0_32 = arith.constant 0 : index
    %66 = vector.load %arg1[%c280, %c0_32] : memref<496x128xf32, #tpu.memory_space<vmem>>, vector<16x32xf32>
    %cst_33 = arith.constant dense<0.000000e+00> : vector<32x32xf32>
    %67 = tpu.matmul %65, %66, %cst_33 {dimension_numbers = #tpu.dot_dimension_numbers<[1], [0], [0], [1], [0, 0, 1, 1], [], []>} : vector<32x16xf32>, vector<16x32xf32>, vector<32x32xf32> -> vector<32x32xf32>
    %68 = arith.addf %37, %67 : vector<32x32xf32>
    %c344 = arith.constant 344 : index
    %c0_34 = arith.constant 0 : index
    %69 = vector.load %arg1[%c344, %c0_34] : memref<496x128xf32, #tpu.memory_space<vmem>>, vector<1x32xf32>
    %70 = vector.broadcast %69 : vector<1x32xf32> to vector<32x32xf32>
    %71 = arith.addf %68, %70 : vector<32x32xf32>
    %72 = arith.addf %6, %71 : vector<32x32xf32>
    %c352 = arith.constant 352 : index
    %c0_35 = arith.constant 0 : index
    %73 = vector.load %arg1[%c352, %c0_35] : memref<496x128xf32, #tpu.memory_space<vmem>>, vector<1x32xf32>
    %c360 = arith.constant 360 : index
    %c0_36 = arith.constant 0 : index
    %74 = vector.load %arg1[%c360, %c0_36] : memref<496x128xf32, #tpu.memory_space<vmem>>, vector<1x32xf32>
    %cst_37 = arith.constant dense<0.000000e+00> : vector<32xf32>
    %75 = vector.multi_reduction <add>, %72, %cst_37 [1] : vector<32x32xf32> to vector<32xf32>
    %76 = vector.shape_cast %75 : vector<32xf32> to vector<32x1xf32>
    %cst_38 = arith.constant 3.200000e+01 : f32
    %77 = vector.broadcast %cst_38 : f32 to vector<32x1xf32>
    %78 = arith.divf %76, %77 : vector<32x1xf32>
    %79 = vector.broadcast %78 : vector<32x1xf32> to vector<32x32xf32>
    %80 = arith.subf %72, %79 : vector<32x32xf32>
    %81 = arith.mulf %80, %80 : vector<32x32xf32>
    %cst_39 = arith.constant dense<0.000000e+00> : vector<32xf32>
    %82 = vector.multi_reduction <add>, %81, %cst_39 [1] : vector<32x32xf32> to vector<32xf32>
    %83 = vector.shape_cast %82 : vector<32xf32> to vector<32x1xf32>
    %cst_40 = arith.constant 3.200000e+01 : f32
    %84 = vector.broadcast %cst_40 : f32 to vector<32x1xf32>
    %85 = arith.divf %83, %84 : vector<32x1xf32>
    %cst_41 = arith.constant 9.99999974E-6 : f32
    %86 = vector.broadcast %cst_41 : f32 to vector<32x1xf32>
    %87 = arith.addf %85, %86 : vector<32x1xf32>
    %88 = math.rsqrt %87 : vector<32x1xf32>
    %89 = vector.broadcast %88 : vector<32x1xf32> to vector<32x32xf32>
    %90 = arith.mulf %80, %89 : vector<32x32xf32>
    %91 = vector.broadcast %73 : vector<1x32xf32> to vector<32x32xf32>
    %92 = arith.mulf %90, %91 : vector<32x32xf32>
    %93 = vector.broadcast %74 : vector<1x32xf32> to vector<32x32xf32>
    %94 = arith.addf %92, %93 : vector<32x32xf32>
    %c368 = arith.constant 368 : index
    %c0_42 = arith.constant 0 : index
    %95 = vector.load %arg1[%c368, %c0_42] : memref<496x128xf32, #tpu.memory_space<vmem>>, vector<32x64xf32>
    %cst_43 = arith.constant dense<0.000000e+00> : vector<32x64xf32>
    %96 = tpu.matmul %94, %95, %cst_43 {dimension_numbers = #tpu.dot_dimension_numbers<[1], [0], [0], [1], [0, 0, 1, 1], [], []>} : vector<32x32xf32>, vector<32x64xf32>, vector<32x64xf32> -> vector<32x64xf32>
    %c400 = arith.constant 400 : index
    %c0_44 = arith.constant 0 : index
    %97 = vector.load %arg1[%c400, %c0_44] : memref<496x128xf32, #tpu.memory_space<vmem>>, vector<1x64xf32>
    %98 = vector.broadcast %97 : vector<1x64xf32> to vector<32x64xf32>
    %99 = arith.addf %96, %98 : vector<32x64xf32>
    %cst_45 = arith.constant 0.000000e+00 : f32
    %100 = vector.broadcast %cst_45 : f32 to vector<32x64xf32>
    %101 = arith.maximumf %99, %100 : vector<32x64xf32>
    %c408 = arith.constant 408 : index
    %c0_46 = arith.constant 0 : index
    %102 = vector.load %arg1[%c408, %c0_46] : memref<496x128xf32, #tpu.memory_space<vmem>>, vector<64x32xf32>
    %cst_47 = arith.constant dense<0.000000e+00> : vector<32x32xf32>
    %103 = tpu.matmul %101, %102, %cst_47 {dimension_numbers = #tpu.dot_dimension_numbers<[1], [0], [0], [1], [0, 0, 1, 1], [], []>} : vector<32x64xf32>, vector<64x32xf32>, vector<32x32xf32> -> vector<32x32xf32>
    %c472 = arith.constant 472 : index
    %c0_48 = arith.constant 0 : index
    %104 = vector.load %arg1[%c472, %c0_48] : memref<496x128xf32, #tpu.memory_space<vmem>>, vector<1x32xf32>
    %105 = vector.broadcast %104 : vector<1x32xf32> to vector<32x32xf32>
    %106 = arith.addf %103, %105 : vector<32x32xf32>
    %107 = arith.addf %94, %106 : vector<32x32xf32>
    %c480 = arith.constant 480 : index
    %c0_49 = arith.constant 0 : index
    %108 = vector.load %arg1[%c480, %c0_49] : memref<496x128xf32, #tpu.memory_space<vmem>>, vector<1x32xf32>
    %c488 = arith.constant 488 : index
    %c0_50 = arith.constant 0 : index
    %109 = vector.load %arg1[%c488, %c0_50] : memref<496x128xf32, #tpu.memory_space<vmem>>, vector<1x32xf32>
    %cst_51 = arith.constant dense<0.000000e+00> : vector<32xf32>
    %110 = vector.multi_reduction <add>, %107, %cst_51 [1] : vector<32x32xf32> to vector<32xf32>
    %111 = vector.shape_cast %110 : vector<32xf32> to vector<32x1xf32>
    %cst_52 = arith.constant 3.200000e+01 : f32
    %112 = vector.broadcast %cst_52 : f32 to vector<32x1xf32>
    %113 = arith.divf %111, %112 : vector<32x1xf32>
    %114 = vector.broadcast %113 : vector<32x1xf32> to vector<32x32xf32>
    %115 = arith.subf %107, %114 : vector<32x32xf32>
    %116 = arith.mulf %115, %115 : vector<32x32xf32>
    %cst_53 = arith.constant dense<0.000000e+00> : vector<32xf32>
    %117 = vector.multi_reduction <add>, %116, %cst_53 [1] : vector<32x32xf32> to vector<32xf32>
    %118 = vector.shape_cast %117 : vector<32xf32> to vector<32x1xf32>
    %cst_54 = arith.constant 3.200000e+01 : f32
    %119 = vector.broadcast %cst_54 : f32 to vector<32x1xf32>
    %120 = arith.divf %118, %119 : vector<32x1xf32>
    %cst_55 = arith.constant 9.99999974E-6 : f32
    %121 = vector.broadcast %cst_55 : f32 to vector<32x1xf32>
    %122 = arith.addf %120, %121 : vector<32x1xf32>
    %123 = math.rsqrt %122 : vector<32x1xf32>
    %124 = vector.broadcast %123 : vector<32x1xf32> to vector<32x32xf32>
    %125 = arith.mulf %115, %124 : vector<32x32xf32>
    %126 = vector.broadcast %108 : vector<1x32xf32> to vector<32x32xf32>
    %127 = arith.mulf %125, %126 : vector<32x32xf32>
    %128 = vector.broadcast %109 : vector<1x32xf32> to vector<32x32xf32>
    %129 = arith.addf %127, %128 : vector<32x32xf32>
    %c0_56 = arith.constant 0 : index
    %c0_57 = arith.constant 0 : index
    %130 = vector.load %arg2[%c0_56, %c0_57] : memref<32x32xf32, #tpu.memory_space<vmem>>, vector<32x32xf32>
    tpu.vector_store %arg2[%c0_56, %c0_57], %129 {strides = array<i32>} : memref<32x32xf32, #tpu.memory_space<vmem>>, vector<32x32xf32>,
    return
  }
}

</mosaic_0001>

<llo_original>
// kernel: tpu_custom_call.1
$region0: #{tpu_custom_call.1}
  #allocation0 [shape = 'u32[]', space=smem, size = 0x4, offset = 0x4, fixed_abs, tag = 'smem constant byte address 0x4 - core index']
  #allocation1 [shape = 'u32[72,128]{1,0:T(1,128)}', space=vmem, size = 0x9000, scoped, tag = 'internal scratch']
  %s0 = inlined_call_operand.vmem [shape: f32[32,1], index: 0, kind: input, shape index: {}]
  %s1 = inlined_call_operand.hbm [shape: f32[496,128], index: 1, kind: input, shape index: {}]
  %s2 = inlined_call_operand.hbm [shape: f32[32,32], index: 2, kind: output, shape index: {}]
  %s3 = sld [smem:[#allocation0]]
  $region22: #{tpu_custom_call.1} parent=0
    _
  %s5 = ssub.s32 1, %s3
  %s6 = scalar_select 0, %s5, %s3
  $region1: #{tpu_custom_call.1} parent=0
    #allocation2 [shape = 'u8[253952]{0}', space=vmem, size = 0x3e000, scoped, tag = 'input window, operand 1, single buffered']
    #allocation3 [shape = 's32[1]{0}', space=sflag, size = 0x4, scoped, tag = 'scoped memory for tpu_custom_call.1']
    #allocation4 [shape = 's32[1]{0}', space=sflag, size = 0x4, scoped, tag = 'scoped memory for tpu_custom_call.1']
    #allocation5 [shape = 'u8[16384]{0}', space=vmem, size = 0x4000, scoped, tag = 'output window, operand 0, single buffered']
    %7 = vsyncpa [#allocation3], 0
    %8 = vsyncpa [#allocation4], 0
    // Predicated region
    $region2: #{tpu_custom_call.1} parent=1 // pred_check
      _
    $region3: #{tpu_custom_call.1} parent=1 // pred_check_branch
      %10 = sbr.rel (0) target = $region5
    $region4: #{tpu_custom_call.1} parent=1 // pred_region
      _
    $region5: #{tpu_custom_call.1} parent=1 // pred_fallthru
      _
    // Predicated region
    $region6: #{tpu_custom_call.1} parent=1 // pred_check
      _
    $region7: #{tpu_custom_call.1} parent=1 // pred_check_branch
      %12 = sbr.rel (0) target = $region9
    $region8: #{tpu_custom_call.1} parent=1 // pred_region
      %14 = vsyncadd [#allocation3], 0
      %s15 = sshll.u32 %s1, 4
      %s16 = int_to_ptr.hbm [resolvable:$true] %s15
      %s17 = sshll.u32 [#allocation2], 4
      %s18 = int_to_ptr.vmem [resolvable:$true] %s17
      %23 = dma.hbm_to_vmem [thread:$0]  %s16, 7936, %s18, [#allocation3], 128, 128, 8
    $region9: #{tpu_custom_call.1} parent=1 // pred_fallthru
      _
    // Predicated region
    $region10: #{tpu_custom_call.1} parent=1 // pred_check
      _
    $region11: #{tpu_custom_call.1} parent=1 // pred_check_branch
      %25 = sbr.rel (0) target = $region13
    $region12: #{tpu_custom_call.1} parent=1 // pred_region
      %27 = dma.done [#allocation3], 7936
    $region13: #{tpu_custom_call.1} parent=1 // pred_fallthru
      _
    %v28 = vld [vmem:[%s0] sm:$0xff]
    %v29 = vld [vmem:[%s0 + $0x8] sm:$0xff]
    %v30 = vld [vmem:[%s0 + $0x10] sm:$0xff]
    %v31 = vld [vmem:[%s0 + $0x18] sm:$0xff]
    %v32 = vld [vmem:[#allocation2] sm:$0x1]
    %34 = vset.pattern.permute.xlu0 0
    %35 = vperm.xlu0 %34, %v28
    %v36 = vpop.permute.xlu0 %35
    %39 = vset.pattern.permute.xlu0 0
    %40 = vperm.xlu0 %39, %v29
    %v41 = vpop.permute.xlu0 %40
    %44 = vset.pattern.permute.xlu0 0
    %45 = vperm.xlu0 %44, %v30
    %v46 = vpop.permute.xlu0 %45
    %49 = vset.pattern.permute.xlu0 0
    %50 = vperm.xlu0 %49, %v31
    %v51 = vpop.permute.xlu0 %50
    %v53 = vperm.slane %v32, 0
    %v54 = vmul.f32 %v36, %v53
    %v55 = vmul.f32 %v41, %v53
    %v56 = vmul.f32 %v46, %v53
    %v57 = vmul.f32 %v51, %v53
    %v58 = vld [vmem:[#allocation2 + $0x8] sm:$0xff]
    %v59 = vld [vmem:[#allocation2 + $0x10] sm:$0xff]
    %v60 = vld [vmem:[#allocation2 + $0x18] sm:$0xff]
    %v61 = vld [vmem:[#allocation2 + $0x20] sm:$0xff]
    %v62 = vadd.f32 %v54, %v58
    %v63 = vadd.f32 %v55, %v59
    %v64 = vadd.f32 %v56, %v60
    %v65 = vadd.f32 %v57, %v61
    %v66 = vld [vmem:[#allocation2 + $0x28] sm:$0xff]
    %v67 = vld [vmem:[#allocation2 + $0x30] sm:$0xff]
    %v68 = vld [vmem:[#allocation2 + $0x38] sm:$0xff]
    %v69 = vld [vmem:[#allocation2 + $0x40] sm:$0xff]
    %v70 = vld [vmem:[#allocation2 + $0x48] sm:$0xff]
    %v71 = vld [vmem:[#allocation2 + $0x50] sm:$0xff]
    %v72 = vld [vmem:[#allocation2 + $0x58] sm:$0xff]
    %v73 = vld [vmem:[#allocation2 + $0x60] sm:$0xff]
    %v74 = vld [vmem:[#allocation2 + $0x128] sm:$0x1]
    %v75 = vperm.slane %v74, 0
    %vm76 = vcmask 261120
    %v78 = vsel %vm76, %v62, 0
    %v81 = vsel %vm76, %v63, 0
    %v84 = vsel %vm76, %v64, 0
    %v87 = vsel %vm76, %v65, 0
    %89 = vmatpush.msra.mxu0 0.0
    %90 = vmatpush.msra.mxu0 0.0
    %91 = vmatpush.msra.mxu0 0.0
    %92 = vmatpush.msra.mxu0 0.0
    %93 = vmatpush.msra.mxu0 0.0
    %94 = vmatpush.msra.mxu0 0.0
    %95 = vmatpush.msra.mxu0 0.0
    %96 = vmatpush.msra.mxu0 0.0
    %97 = vmatpush.msra.mxu0 0.0
    %98 = vmatpush.msra.mxu0 0.0
    %99 = vmatpush.msra.mxu0 0.0
    %100 = vmatpush.msra.mxu0 0.0
    %101 = vmatpush.msra.mxu0 %v73
    %102 = vmatpush.msra.mxu0 %v72
    %103 = vmatpush.msra.mxu0 %v71
    %104 = vmatpush.msra.mxu0 %v70
    %105 = vmatmul.f32.gmra.mxu0 %v78
    %v106 = vpop.f32.mrf.mxu0
    %v107 = vadd.f32 %v75, %v106
    %108 = vmatmul.f32.gmra.mxu0 %v81
    %v109 = vpop.f32.mrf.mxu0
    %v110 = vadd.f32 %v75, %v109
    %111 = vmatmul.f32.gmra.mxu0 %v84
    %v112 = vpop.f32.mrf.mxu0
    %v113 = vadd.f32 %v75, %v112
    %114 = vmatmul.f32.gmra.mxu0 %v87
    %v115 = vpop.f32.mrf.mxu0
    %v116 = vadd.f32 %v75, %v115
    %117 = vdwg.mxu0
    %v118 = vld [vmem:[#allocation2 + $0x88] sm:$0xff]
    %v119 = vld [vmem:[#allocation2 + $0x90] sm:$0xff]
    %v120 = vld [vmem:[#allocation2 + $0x98] sm:$0xff]
    %v121 = vld [vmem:[#allocation2 + $0xa0] sm:$0xff]
    %v122 = vld [vmem:[#allocation2 + $0x138] sm:$0x1]
    %v123 = vperm.slane %v122, 0
    %124 = vmatpush.msra.mxu0 0.0
    %125 = vmatpush.msra.mxu0 0.0
    %126 = vmatpush.msra.mxu0 0.0
    %127 = vmatpush.msra.mxu0 0.0
    %128 = vmatpush.msra.mxu0 0.0
    %129 = vmatpush.msra.mxu0 0.0
    %130 = vmatpush.msra.mxu0 0.0
    %131 = vmatpush.msra.mxu0 0.0
    %132 = vmatpush.msra.mxu0 0.0
    %133 = vmatpush.msra.mxu0 0.0
    %134 = vmatpush.msra.mxu0 0.0
    %135 = vmatpush.msra.mxu0 0.0
    %136 = vmatpush.msra.mxu0 %v121
    %137 = vmatpush.msra.mxu0 %v120
    %138 = vmatpush.msra.mxu0 %v119
    %139 = vmatpush.msra.mxu0 %v118
    %140 = vmatmul.f32.gmra.mxu0 %v78
    %v141 = vpop.f32.mrf.mxu0
    %v142 = vadd.f32 %v123, %v141
    %143 = vmatmul.f32.gmra.mxu0 %v81
    %v144 = vpop.f32.mrf.mxu0
    %v145 = vadd.f32 %v123, %v144
    %146 = vmatmul.f32.gmra.mxu0 %v84
    %v147 = vpop.f32.mrf.mxu0
    %v148 = vadd.f32 %v123, %v147
    %149 = vmatmul.f32.gmra.mxu0 %v87
    %v150 = vpop.f32.mrf.mxu0
    %v151 = vadd.f32 %v123, %v150
    %152 = vdwg.mxu0
    %v153 = vld [vmem:[#allocation2 + $0xc8] sm:$0xff]
    %v154 = vld [vmem:[#allocation2 + $0xd0] sm:$0xff]
    %v155 = vld [vmem:[#allocation2 + $0xd8] sm:$0xff]
    %v156 = vld [vmem:[#allocation2 + $0xe0] sm:$0xff]
    %v157 = vld [vmem:[#allocation2 + $0x148] sm:$0x1]
    %v158 = vperm.slane %v157, 0
    %159 = vmatpush.msra.mxu0 0.0
    %160 = vmatpush.msra.mxu0 0.0
    %161 = vmatpush.msra.mxu0 0.0
    %162 = vmatpush.msra.mxu0 0.0
    %163 = vmatpush.msra.mxu0 0.0
    %164 = vmatpush.msra.mxu0 0.0
    %165 = vmatpush.msra.mxu0 0.0
    %166 = vmatpush.msra.mxu0 0.0
    %167 = vmatpush.msra.mxu0 0.0
    %168 = vmatpush.msra.mxu0 0.0
    %169 = vmatpush.msra.mxu0 0.0
    %170 = vmatpush.msra.mxu0 0.0
    %171 = vmatpush.msra.mxu0 %v156
    %172 = vmatpush.msra.mxu0 %v155
    %173 = vmatpush.msra.mxu0 %v154
    %174 = vmatpush.msra.mxu0 %v153
    %175 = vmatmul.f32.gmra.mxu0 %v78
    %v176 = vpop.f32.mrf.mxu0
    %v177 = vadd.f32 %v158, %v176
    %178 = vmatmul.f32.gmra.mxu0 %v81
    %v179 = vpop.f32.mrf.mxu0
    %v180 = vadd.f32 %v158, %v179
    %181 = vmatmul.f32.gmra.mxu0 %v84
    %v182 = vpop.f32.mrf.mxu0
    %v183 = vadd.f32 %v158, %v182
    %184 = vmatmul.f32.gmra.mxu0 %v87
    %v185 = vpop.f32.mrf.mxu0
    %v186 = vadd.f32 %v158, %v185
    %187 = vdwg.mxu0
    %vm188 = vcmask 130048
    %v190 = vsel %vm188, %v107, 0
    %v193 = vsel %vm188, %v110, 0
    %v196 = vsel %vm188, %v113, 0
    %v199 = vsel %vm188, %v116, 0
    %v202 = vsel %vm188, %v142, 0
    %v205 = vsel %vm188, %v145, 0
    %v208 = vsel %vm188, %v148, 0
    %v211 = vsel %vm188, %v151, 0
    %213 = vmatpush.xpose.msra.mxu0 0.0
    %214 = vmatpush.xpose.msra.mxu0 0.0
    %215 = vmatpush.xpose.msra.mxu0 0.0
    %216 = vmatpush.xpose.msra.mxu0 0.0
    %217 = vmatpush.xpose.msra.mxu0 0.0
    %218 = vmatpush.xpose.msra.mxu0 0.0
    %219 = vmatpush.xpose.msra.mxu0 0.0
    %220 = vmatpush.xpose.msra.mxu0 0.0
    %221 = vmatpush.xpose.msra.mxu0 0.0
    %222 = vmatpush.xpose.msra.mxu0 0.0
    %223 = vmatpush.xpose.msra.mxu0 0.0
    %224 = vmatpush.xpose.msra.mxu0 0.0
    %225 = vmatpush.xpose.msra.mxu0 %v211
    %226 = vmatpush.xpose.msra.mxu0 %v208
    %227 = vmatpush.xpose.msra.mxu0 %v205
    %228 = vmatpush.xpose.msra.mxu0 %v202
    %229 = vmatmul.f32.gmra.mxu0 %v190
    %v230 = vpop.f32.mrf.mxu0
    %v231 = vadd.f32 %v66, %v230
    %232 = vmatmul.f32.gmra.mxu0 %v193
    %v233 = vpop.f32.mrf.mxu0
    %v234 = vadd.f32 %v67, %v233
    %235 = vmatmul.f32.gmra.mxu0 %v196
    %v236 = vpop.f32.mrf.mxu0
    %v237 = vadd.f32 %v68, %v236
    %238 = vmatmul.f32.gmra.mxu0 %v199
    %v239 = vpop.f32.mrf.mxu0
    %v240 = vadd.f32 %v69, %v239
    %241 = vdwg.mxu0
    %v242 = vsel %vm76, %v231, -inf
    %243 = vmax.xlane.f32.xlu0 %v242
    %v244 = vpop.xlane.xlu0 %243
    %v245 = vsel %vm76, %v234, -inf
    %246 = vmax.xlane.f32.xlu0 %v245
    %v247 = vpop.xlane.xlu0 %246
    %v248 = vsel %vm76, %v237, -inf
    %249 = vmax.xlane.f32.xlu0 %v248
    %v250 = vpop.xlane.xlu0 %249
    %v251 = vsel %vm76, %v240, -inf
    %252 = vmax.xlane.f32.xlu0 %v251
    %v253 = vpop.xlane.xlu0 %252
    %v254 = vsub.f32 %v231, %v244
    %v255 = vsub.f32 %v234, %v247
    %v256 = vsub.f32 %v237, %v250
    %v257 = vsub.f32 %v240, %v253
    %v258 = vmul.f32 %v254, 1.442695
    %v259 = vpow.pop %v258
    %v260 = vmul.f32 %v255, 1.442695
    %v261 = vpow.pop %v260
    %v262 = vmul.f32 %v256, 1.442695
    %v263 = vpow.pop %v262
    %v264 = vmul.f32 %v257, 1.442695
    %v265 = vpow.pop %v264
    %v266 = vsel %vm76, %v259, 0.0
    %267 = vadd.xlane.f32.xlu0 %v266
    %v268 = vpop.xlane.xlu0 %267
    %v269 = vsel %vm76, %v261, 0.0
    %270 = vadd.xlane.f32.xlu0 %v269
    %v271 = vpop.xlane.xlu0 %270
    %v272 = vsel %vm76, %v263, 0.0
    %273 = vadd.xlane.f32.xlu0 %v272
    %v274 = vpop.xlane.xlu0 %273
    %v275 = vsel %vm76, %v265, 0.0
    %276 = vadd.xlane.f32.xlu0 %v275
    %v277 = vpop.xlane.xlu0 %276
    %v278 = vrcp.pop %v268
    %v279 = vrcp.pop %v271
    %v280 = vrcp.pop %v274
    %v281 = vrcp.pop %v277
    %v282 = vmul.f32 %v259, %v278
    %v283 = vmul.f32 %v261, %v279
    %v284 = vmul.f32 %v263, %v280
    %v285 = vmul.f32 %v265, %v281
    %v287 = vsel %vm76, %v282, 0
    %v290 = vsel %vm76, %v283, 0
    %v293 = vsel %vm76, %v284, 0
    %v296 = vsel %vm76, %v285, 0
    %298 = vmatpush.msra.mxu0 0.0
    %299 = vmatpush.msra.mxu0 0.0
    %300 = vmatpush.msra.mxu0 0.0
    %301 = vmatpush.msra.mxu0 0.0
    %302 = vmatpush.msra.mxu0 0.0
    %303 = vmatpush.msra.mxu0 0.0
    %304 = vmatpush.msra.mxu0 0.0
    %305 = vmatpush.msra.mxu0 0.0
    %306 = vmatpush.msra.mxu0 0.0
    %307 = vmatpush.msra.mxu0 0.0
    %308 = vmatpush.msra.mxu0 0.0
    %309 = vmatpush.msra.mxu0 0.0
    %310 = vmatpush.msra.mxu0 %v186
    %311 = vmatpush.msra.mxu0 %v183
    %312 = vmatpush.msra.mxu0 %v180
    %313 = vmatpush.msra.mxu0 %v177
    %314 = vmatmul.f32.gmra.mxu0 %v287
    %v315 = vpop.f32.mrf.mxu0
    %v316 = vadd.f32 0.0, %v315
    %317 = vmatmul.f32.gmra.mxu0 %v290
    %v318 = vpop.f32.mrf.mxu0
    %v319 = vadd.f32 0.0, %v318
    %320 = vmatmul.f32.gmra.mxu0 %v293
    %v321 = vpop.f32.mrf.mxu0
    %v322 = vadd.f32 0.0, %v321
    %323 = vmatmul.f32.gmra.mxu0 %v296
    %v324 = vpop.f32.mrf.mxu0
    %v325 = vadd.f32 0.0, %v324
    %326 = vdwg.mxu0
    %v327 = vld [vmem:[#allocation2 + $0x108] sm:$0xff]
    %v328 = vld [vmem:[#allocation2 + $0x110] sm:$0xff]
    %v329 = vld [vmem:[#allocation2 + $0x68] sm:$0xff]
    %v330 = vld [vmem:[#allocation2 + $0x70] sm:$0xff]
    %v331 = vld [vmem:[#allocation2 + $0x78] sm:$0xff]
    %v332 = vld [vmem:[#allocation2 + $0x80] sm:$0xff]
    %v333 = vld [vmem:[#allocation2 + $0x130] sm:$0x1]
    %v334 = vperm.slane %v333, 0
    %335 = vmatpush.msra.mxu0 0.0
    %336 = vmatpush.msra.mxu0 0.0
    %337 = vmatpush.msra.mxu0 0.0
    %338 = vmatpush.msra.mxu0 0.0
    %339 = vmatpush.msra.mxu0 0.0
    %340 = vmatpush.msra.mxu0 0.0
    %341 = vmatpush.msra.mxu0 0.0
    %342 = vmatpush.msra.mxu0 0.0
    %343 = vmatpush.msra.mxu0 0.0
    %344 = vmatpush.msra.mxu0 0.0
    %345 = vmatpush.msra.mxu0 0.0
    %346 = vmatpush.msra.mxu0 0.0
    %347 = vmatpush.msra.mxu0 %v332
    %348 = vmatpush.msra.mxu0 %v331
    %349 = vmatpush.msra.mxu0 %v330
    %350 = vmatpush.msra.mxu0 %v329
    %351 = vmatmul.f32.gmra.mxu0 %v78
    %v352 = vpop.f32.mrf.mxu0
    %v353 = vadd.f32 %v334, %v352
    %354 = vmatmul.f32.gmra.mxu0 %v81
    %v355 = vpop.f32.mrf.mxu0
    %v356 = vadd.f32 %v334, %v355
    %357 = vmatmul.f32.gmra.mxu0 %v84
    %v358 = vpop.f32.mrf.mxu0
    %v359 = vadd.f32 %v334, %v358
    %360 = vmatmul.f32.gmra.mxu0 %v87
    %v361 = vpop.f32.mrf.mxu0
    %v362 = vadd.f32 %v334, %v361
    %363 = vdwg.mxu0
    %v364 = vld [vmem:[#allocation2 + $0xa8] sm:$0xff]
    %v365 = vld [vmem:[#allocation2 + $0xb0] sm:$0xff]
    %v366 = vld [vmem:[#allocation2 + $0xb8] sm:$0xff]
    %v367 = vld [vmem:[#allocation2 + $0xc0] sm:$0xff]
    %v368 = vld [vmem:[#allocation2 + $0x140] sm:$0x1]
    %v369 = vperm.slane %v368, 0
    %370 = vmatpush.msra.mxu0 0.0
    %371 = vmatpush.msra.mxu0 0.0
    %372 = vmatpush.msra.mxu0 0.0
    %373 = vmatpush.msra.mxu0 0.0
    %374 = vmatpush.msra.mxu0 0.0
    %375 = vmatpush.msra.mxu0 0.0
    %376 = vmatpush.msra.mxu0 0.0
    %377 = vmatpush.msra.mxu0 0.0
    %378 = vmatpush.msra.mxu0 0.0
    %379 = vmatpush.msra.mxu0 0.0
    %380 = vmatpush.msra.mxu0 0.0
    %381 = vmatpush.msra.mxu0 0.0
    %382 = vmatpush.msra.mxu0 %v367
    %383 = vmatpush.msra.mxu0 %v366
    %384 = vmatpush.msra.mxu0 %v365
    %385 = vmatpush.msra.mxu0 %v364
    %386 = vmatmul.f32.gmra.mxu0 %v78
    %v387 = vpop.f32.mrf.mxu0
    %v388 = vadd.f32 %v369, %v387
    %389 = vmatmul.f32.gmra.mxu0 %v81
    %v390 = vpop.f32.mrf.mxu0
    %v391 = vadd.f32 %v369, %v390
    %392 = vmatmul.f32.gmra.mxu0 %v84
    %v393 = vpop.f32.mrf.mxu0
    %v394 = vadd.f32 %v369, %v393
    %395 = vmatmul.f32.gmra.mxu0 %v87
    %v396 = vpop.f32.mrf.mxu0
    %v397 = vadd.f32 %v369, %v396
    %398 = vdwg.mxu0
    %v399 = vld [vmem:[#allocation2 + $0xe8] sm:$0xff]
    %v400 = vld [vmem:[#allocation2 + $0xf0] sm:$0xff]
    %v401 = vld [vmem:[#allocation2 + $0xf8] sm:$0xff]
    %v402 = vld [vmem:[#allocation2 + $0x100] sm:$0xff]
    %v403 = vld [vmem:[#allocation2 + $0x150] sm:$0x1]
    %v404 = vperm.slane %v403, 0
    %405 = vmatpush.msra.mxu0 0.0
    %406 = vmatpush.msra.mxu0 0.0
    %407 = vmatpush.msra.mxu0 0.0
    %408 = vmatpush.msra.mxu0 0.0
    %409 = vmatpush.msra.mxu0 0.0
    %410 = vmatpush.msra.mxu0 0.0
    %411 = vmatpush.msra.mxu0 0.0
    %412 = vmatpush.msra.mxu0 0.0
    %413 = vmatpush.msra.mxu0 0.0
    %414 = vmatpush.msra.mxu0 0.0
    %415 = vmatpush.msra.mxu0 0.0
    %416 = vmatpush.msra.mxu0 0.0
    %417 = vmatpush.msra.mxu0 %v402
    %418 = vmatpush.msra.mxu0 %v401
    %419 = vmatpush.msra.mxu0 %v400
    %420 = vmatpush.msra.mxu0 %v399
    %421 = vmatmul.f32.gmra.mxu0 %v78
    %v422 = vpop.f32.mrf.mxu0
    %v423 = vadd.f32 %v404, %v422
    %424 = vmatmul.f32.gmra.mxu0 %v81
    %v425 = vpop.f32.mrf.mxu0
    %v426 = vadd.f32 %v404, %v425
    %427 = vmatmul.f32.gmra.mxu0 %v84
    %v428 = vpop.f32.mrf.mxu0
    %v429 = vadd.f32 %v404, %v428
    %430 = vmatmul.f32.gmra.mxu0 %v87
    %v431 = vpop.f32.mrf.mxu0
    %v432 = vadd.f32 %v404, %v431
    %433 = vdwg.mxu0
    %v435 = vsel %vm188, %v353, 0
    %v438 = vsel %vm188, %v356, 0
    %v441 = vsel %vm188, %v359, 0
    %v444 = vsel %vm188, %v362, 0
    %v447 = vsel %vm188, %v388, 0
    %v450 = vsel %vm188, %v391, 0
    %v453 = vsel %vm188, %v394, 0
    %v456 = vsel %vm188, %v397, 0
    %458 = vmatpush.xpose.msra.mxu0 0.0
    %459 = vmatpush.xpose.msra.mxu0 0.0
    %460 = vmatpush.xpose.msra.mxu0 0.0
    %461 = vmatpush.xpose.msra.mxu0 0.0
    %462 = vmatpush.xpose.msra.mxu0 0.0
    %463 = vmatpush.xpose.msra.mxu0 0.0
    %464 = vmatpush.xpose.msra.mxu0 0.0
    %465 = vmatpush.xpose.msra.mxu0 0.0
    %466 = vmatpush.xpose.msra.mxu0 0.0
    %467 = vmatpush.xpose.msra.mxu0 0.0
    %468 = vmatpush.xpose.msra.mxu0 0.0
    %469 = vmatpush.xpose.msra.mxu0 0.0
    %470 = vmatpush.xpose.msra.mxu0 %v456
    %471 = vmatpush.xpose.msra.mxu0 %v453
    %472 = vmatpush.xpose.msra.mxu0 %v450
    %473 = vmatpush.xpose.msra.mxu0 %v447
    %474 = vmatmul.f32.gmra.mxu0 %v435
    %v475 = vpop.f32.mrf.mxu0
    %v476 = vadd.f32 %v66, %v475
    %477 = vmatmul.f32.gmra.mxu0 %v438
    %v478 = vpop.f32.mrf.mxu0
    %v479 = vadd.f32 %v67, %v478
    %480 = vmatmul.f32.gmra.mxu0 %v441
    %v481 = vpop.f32.mrf.mxu0
    %v482 = vadd.f32 %v68, %v481
    %483 = vmatmul.f32.gmra.mxu0 %v444
    %v484 = vpop.f32.mrf.mxu0
    %v485 = vadd.f32 %v69, %v484
    %486 = vdwg.mxu0
    %v487 = vsel %vm76, %v476, -inf
    %488 = vmax.xlane.f32.xlu0 %v487
    %v489 = vpop.xlane.xlu0 %488
    %v490 = vsel %vm76, %v479, -inf
    %491 = vmax.xlane.f32.xlu0 %v490
    %v492 = vpop.xlane.xlu0 %491
    %v493 = vsel %vm76, %v482, -inf
    %494 = vmax.xlane.f32.xlu0 %v493
    %v495 = vpop.xlane.xlu0 %494
    %v496 = vsel %vm76, %v485, -inf
    %497 = vmax.xlane.f32.xlu0 %v496
    %v498 = vpop.xlane.xlu0 %497
    %v499 = vsub.f32 %v476, %v489
    %v500 = vsub.f32 %v479, %v492
    %v501 = vsub.f32 %v482, %v495
    %v502 = vsub.f32 %v485, %v498
    %v503 = vmul.f32 %v499, 1.442695
    %v504 = vpow.pop %v503
    %v505 = vmul.f32 %v500, 1.442695
    %v506 = vpow.pop %v505
    %v507 = vmul.f32 %v501, 1.442695
    %v508 = vpow.pop %v507
    %v509 = vmul.f32 %v502, 1.442695
    %v510 = vpow.pop %v509
    %v511 = vsel %vm76, %v504, 0.0
    %512 = vadd.xlane.f32.xlu0 %v511
    %v513 = vpop.xlane.xlu0 %512
    %v514 = vsel %vm76, %v506, 0.0
    %515 = vadd.xlane.f32.xlu0 %v514
    %v516 = vpop.xlane.xlu0 %515
    %v517 = vsel %vm76, %v508, 0.0
    %518 = vadd.xlane.f32.xlu0 %v517
    %v519 = vpop.xlane.xlu0 %518
    %v520 = vsel %vm76, %v510, 0.0
    %521 = vadd.xlane.f32.xlu0 %v520
    %v522 = vpop.xlane.xlu0 %521
    %v523 = vrcp.pop %v513
    %v524 = vrcp.pop %v516
    %v525 = vrcp.pop %v519
    %v526 = vrcp.pop %v522
    %v527 = vmul.f32 %v504, %v523
    %v528 = vmul.f32 %v506, %v524
    %v529 = vmul.f32 %v508, %v525
    %v530 = vmul.f32 %v510, %v526
    %v532 = vsel %vm76, %v527, 0
    %v535 = vsel %vm76, %v528, 0
    %v538 = vsel %vm76, %v529, 0
    %v541 = vsel %vm76, %v530, 0
    %543 = vmatpush.msra.mxu0 0.0
    %544 = vmatpush.msra.mxu0 0.0
    %545 = vmatpush.msra.mxu0 0.0
    %546 = vmatpush.msra.mxu0 0.0
    %547 = vmatpush.msra.mxu0 0.0
    %548 = vmatpush.msra.mxu0 0.0
    %549 = vmatpush.msra.mxu0 0.0
    %550 = vmatpush.msra.mxu0 0.0
    %551 = vmatpush.msra.mxu0 0.0
    %552 = vmatpush.msra.mxu0 0.0
    %553 = vmatpush.msra.mxu0 0.0
    %554 = vmatpush.msra.mxu0 0.0
    %555 = vmatpush.msra.mxu0 %v432
    %556 = vmatpush.msra.mxu0 %v429
    %557 = vmatpush.msra.mxu0 %v426
    %558 = vmatpush.msra.mxu0 %v423
    %559 = vmatmul.f32.gmra.mxu0 %v532
    %v560 = vpop.f32.mrf.mxu0
    %v561 = vadd.f32 0.0, %v560
    %562 = vmatmul.f32.gmra.mxu0 %v535
    %v563 = vpop.f32.mrf.mxu0
    %v564 = vadd.f32 0.0, %v563
    %565 = vmatmul.f32.gmra.mxu0 %v538
    %v566 = vpop.f32.mrf.mxu0
    %v567 = vadd.f32 0.0, %v566
    %568 = vmatmul.f32.gmra.mxu0 %v541
    %v569 = vpop.f32.mrf.mxu0
    %v570 = vadd.f32 0.0, %v569
    %571 = vdwg.mxu0
    %v572 = vld [vmem:[#allocation2 + $0x118] sm:$0xff]
    %v573 = vld [vmem:[#allocation2 + $0x120] sm:$0xff]
    %v575 = vsel %vm188, %v561, 0
    %v578 = vsel %vm188, %v564, 0
    %v581 = vsel %vm188, %v567, 0
    %v584 = vsel %vm188, %v570, 0
    %586 = vmatpush.msra.mxu0 0.0
    %587 = vmatpush.msra.mxu0 0.0
    %588 = vmatpush.msra.mxu0 0.0
    %589 = vmatpush.msra.mxu0 0.0
    %590 = vmatpush.msra.mxu0 0.0
    %591 = vmatpush.msra.mxu0 0.0
    %592 = vmatpush.msra.mxu0 0.0
    %593 = vmatpush.msra.mxu0 0.0
    %594 = vmatpush.msra.mxu0 0.0
    %595 = vmatpush.msra.mxu0 0.0
    %596 = vmatpush.msra.mxu0 0.0
    %597 = vmatpush.msra.mxu0 0.0
    %598 = vmatpush.msra.mxu0 0.0
    %599 = vmatpush.msra.mxu0 0.0
    %600 = vmatpush.msra.mxu0 %v573
    %601 = vmatpush.msra.mxu0 %v572
    %602 = vmatmul.f32.gmra.mxu0 %v575
    %v603 = vpop.f32.mrf.mxu0
    %v604 = vadd.f32 0.0, %v603
    %605 = vmatmul.f32.gmra.mxu0 %v578
    %v606 = vpop.f32.mrf.mxu0
    %v607 = vadd.f32 0.0, %v606
    %608 = vmatmul.f32.gmra.mxu0 %v581
    %v609 = vpop.f32.mrf.mxu0
    %v610 = vadd.f32 0.0, %v609
    %611 = vmatmul.f32.gmra.mxu0 %v584
    %v612 = vpop.f32.mrf.mxu0
    %v613 = vadd.f32 0.0, %v612
    %614 = vdwg.mxu0
    %v616 = vsel %vm188, %v316, 0
    %v619 = vsel %vm188, %v319, 0
    %v622 = vsel %vm188, %v322, 0
    %v625 = vsel %vm188, %v325, 0
    %627 = vmatpush.msra.mxu0 0.0
    %628 = vmatpush.msra.mxu0 0.0
    %629 = vmatpush.msra.mxu0 0.0
    %630 = vmatpush.msra.mxu0 0.0
    %631 = vmatpush.msra.mxu0 0.0
    %632 = vmatpush.msra.mxu0 0.0
    %633 = vmatpush.msra.mxu0 0.0
    %634 = vmatpush.msra.mxu0 0.0
    %635 = vmatpush.msra.mxu0 0.0
    %636 = vmatpush.msra.mxu0 0.0
    %637 = vmatpush.msra.mxu0 0.0
    %638 = vmatpush.msra.mxu0 0.0
    %639 = vmatpush.msra.mxu0 0.0
    %640 = vmatpush.msra.mxu0 0.0
    %641 = vmatpush.msra.mxu0 %v328
    %642 = vmatpush.msra.mxu0 %v327
    %643 = vmatmul.f32.gmra.mxu0 %v616
    %v644 = vpop.f32.mrf.mxu0
    %v645 = vadd.f32 %v604, %v644
    %646 = vmatmul.f32.gmra.mxu0 %v619
    %v647 = vpop.f32.mrf.mxu0
    %v648 = vadd.f32 %v607, %v647
    %649 = vmatmul.f32.gmra.mxu0 %v622
    %v650 = vpop.f32.mrf.mxu0
    %v651 = vadd.f32 %v610, %v650
    %652 = vmatmul.f32.gmra.mxu0 %v625
    %v653 = vpop.f32.mrf.mxu0
    %v654 = vadd.f32 %v613, %v653
    %655 = vdwg.mxu0
    %v656 = vld [vmem:[#allocation2 + $0x158] sm:$0x1]
    %v657 = vperm.slane %v656, 0
    %v658 = vadd.f32 %v645, %v657
    %v659 = vadd.f32 %v648, %v657
    %v660 = vadd.f32 %v651, %v657
    %v661 = vadd.f32 %v654, %v657
    %v662 = vadd.f32 %v62, %v658
    %v663 = vadd.f32 %v63, %v659
    %v664 = vadd.f32 %v64, %v660
    %v665 = vadd.f32 %v65, %v661
    %v666 = vld [vmem:[#allocation2 + $0x160] sm:$0x1]
    %v667 = vld [vmem:[#allocation2 + $0x168] sm:$0x1]
    %v668 = vsel %vm76, %v662, 0.0
    %669 = vadd.xlane.f32.xlu0 %v668
    %v670 = vpop.xlane.xlu0 %669
    %v671 = vsel %vm76, %v663, 0.0
    %672 = vadd.xlane.f32.xlu0 %v671
    %v673 = vpop.xlane.xlu0 %672
    %v674 = vsel %vm76, %v664, 0.0
    %675 = vadd.xlane.f32.xlu0 %v674
    %v676 = vpop.xlane.xlu0 %675
    %v677 = vsel %vm76, %v665, 0.0
    %678 = vadd.xlane.f32.xlu0 %v677
    %v679 = vpop.xlane.xlu0 %678
    %v680 = vrcp.pop 32.0
    %v681 = vmul.f32 32.0, %v680
    %v682 = vsub.f32 1.0, %v681
    %v683 = vmul.f32 %v680, %v682
    %v684 = vadd.f32 %v680, %v683
    %vm685 = vweird.f32 %v680
    %v686 = vsel %vm685, %v680, %v684
    %v687 = vmul.f32 %v670, %v686
    %v688 = vmul.f32 %v673, %v686
    %v689 = vmul.f32 %v676, %v686
    %v690 = vmul.f32 %v679, %v686
    %v691 = vsub.f32 %v662, %v687
    %v692 = vsub.f32 %v663, %v688
    %v693 = vsub.f32 %v664, %v689
    %v694 = vsub.f32 %v665, %v690
    %v695 = vmul.f32 %v691, %v691
    %v696 = vmul.f32 %v692, %v692
    %v697 = vmul.f32 %v693, %v693
    %v698 = vmul.f32 %v694, %v694
    %v699 = vsel %vm76, %v695, 0.0
    %700 = vadd.xlane.f32.xlu0 %v699
    %v701 = vpop.xlane.xlu0 %700
    %v702 = vsel %vm76, %v696, 0.0
    %703 = vadd.xlane.f32.xlu0 %v702
    %v704 = vpop.xlane.xlu0 %703
    %v705 = vsel %vm76, %v697, 0.0
    %706 = vadd.xlane.f32.xlu0 %v705
    %v707 = vpop.xlane.xlu0 %706
    %v708 = vsel %vm76, %v698, 0.0
    %709 = vadd.xlane.f32.xlu0 %v708
    %v710 = vpop.xlane.xlu0 %709
    %v711 = vmul.f32 %v701, %v686
    %v712 = vmul.f32 %v704, %v686
    %v713 = vmul.f32 %v707, %v686
    %v714 = vmul.f32 %v710, %v686
    %v715 = vadd.f32 %v711, 1e-05
    %v716 = vadd.f32 %v712, 1e-05
    %v717 = vadd.f32 %v713, 1e-05
    %v718 = vadd.f32 %v714, 1e-05
    %v719 = vrsqrt.pop %v715
    %v720 = vmul.f32 %v719, %v715
    %v721 = vmul.f32 %v720, %v719
    %v722 = vmul.f32 0.5, %v721
    %v723 = vsub.f32 1.5, %v722
    %v724 = vmul.f32 %v719, %v723
    %vm725 = vweird.f32 %v715
    %vm726 = vweird.f32 %v719
    %vm727 = vmor %vm725, %vm726
    %v728 = vsel %vm727, %v719, %v724
    %v729 = vrsqrt.pop %v716
    %v730 = vmul.f32 %v729, %v716
    %v731 = vmul.f32 %v730, %v729
    %v732 = vmul.f32 0.5, %v731
    %v733 = vsub.f32 1.5, %v732
    %v734 = vmul.f32 %v729, %v733
    %vm735 = vweird.f32 %v716
    %vm736 = vweird.f32 %v729
    %vm737 = vmor %vm735, %vm736
    %v738 = vsel %vm737, %v729, %v734
    %v739 = vrsqrt.pop %v717
    %v740 = vmul.f32 %v739, %v717
    %v741 = vmul.f32 %v740, %v739
    %v742 = vmul.f32 0.5, %v741
    %v743 = vsub.f32 1.5, %v742
    %v744 = vmul.f32 %v739, %v743
    %vm745 = vweird.f32 %v717
    %vm746 = vweird.f32 %v739
    %vm747 = vmor %vm745, %vm746
    %v748 = vsel %vm747, %v739, %v744
    %v749 = vrsqrt.pop %v718
    %v750 = vmul.f32 %v749, %v718
    %v751 = vmul.f32 %v750, %v749
    %v752 = vmul.f32 0.5, %v751
    %v753 = vsub.f32 1.5, %v752
    %v754 = vmul.f32 %v749, %v753
    %vm755 = vweird.f32 %v718
    %vm756 = vweird.f32 %v749
    %vm757 = vmor %vm755, %vm756
    %v758 = vsel %vm757, %v749, %v754
    %v759 = vmul.f32 %v691, %v728
    %v760 = vmul.f32 %v692, %v738
    %v761 = vmul.f32 %v693, %v748
    %v762 = vmul.f32 %v694, %v758
    %v763 = vperm.slane %v666, 0
    %v764 = vmul.f32 %v759, %v763
    %v765 = vmul.f32 %v760, %v763
    %v766 = vmul.f32 %v761, %v763
    %v767 = vmul.f32 %v762, %v763
    %v768 = vperm.slane %v667, 0
    %v769 = vadd.f32 %v764, %v768
    %v770 = vadd.f32 %v765, %v768
    %v771 = vadd.f32 %v766, %v768
    %v772 = vadd.f32 %v767, %v768
    %v773 = vld [vmem:[#allocation2 + $0x170] sm:$0xff]
    %v774 = vld [vmem:[#allocation2 + $0x178] sm:$0xff]
    %v775 = vld [vmem:[#allocation2 + $0x180] sm:$0xff]
    %v776 = vld [vmem:[#allocation2 + $0x188] sm:$0xff]
    %v777 = vld [vmem:[#allocation2 + $0x190] sm:$0x1]
    %v778 = vperm.slane %v777, 0
    %v780 = vsel %vm76, %v769, 0
    %v783 = vsel %vm76, %v770, 0
    %v786 = vsel %vm76, %v771, 0
    %v789 = vsel %vm76, %v772, 0
    %791 = vmatpush.msra.mxu0 0.0
    %792 = vmatpush.msra.mxu0 0.0
    %793 = vmatpush.msra.mxu0 0.0
    %794 = vmatpush.msra.mxu0 0.0
    %795 = vmatpush.msra.mxu0 0.0
    %796 = vmatpush.msra.mxu0 0.0
    %797 = vmatpush.msra.mxu0 0.0
    %798 = vmatpush.msra.mxu0 0.0
    %799 = vmatpush.msra.mxu0 0.0
    %800 = vmatpush.msra.mxu0 0.0
    %801 = vmatpush.msra.mxu0 0.0
    %802 = vmatpush.msra.mxu0 0.0
    %803 = vmatpush.msra.mxu0 %v776
    %804 = vmatpush.msra.mxu0 %v775
    %805 = vmatpush.msra.mxu0 %v774
    %806 = vmatpush.msra.mxu0 %v773
    %807 = vmatmul.f32.gmra.mxu0 %v780
    %v808 = vpop.f32.mrf.mxu0
    %v809 = vadd.f32 %v778, %v808
    %810 = vmatmul.f32.gmra.mxu0 %v783
    %v811 = vpop.f32.mrf.mxu0
    %v812 = vadd.f32 %v778, %v811
    %813 = vmatmul.f32.gmra.mxu0 %v786
    %v814 = vpop.f32.mrf.mxu0
    %v815 = vadd.f32 %v778, %v814
    %816 = vmatmul.f32.gmra.mxu0 %v789
    %v817 = vpop.f32.mrf.mxu0
    %v818 = vadd.f32 %v778, %v817
    %819 = vdwg.mxu0
    %v820 = vmax.f32 %v809, 0.0
    %v821 = vmax.f32 %v812, 0.0
    %v822 = vmax.f32 %v815, 0.0
    %v823 = vmax.f32 %v818, 0.0
    %v824 = vld [vmem:[#allocation2 + $0x198] sm:$0xff]
    %v825 = vld [vmem:[#allocation2 + $0x1a0] sm:$0xff]
    %v826 = vld [vmem:[#allocation2 + $0x1a8] sm:$0xff]
    %v827 = vld [vmem:[#allocation2 + $0x1b0] sm:$0xff]
    %v828 = vld [vmem:[#allocation2 + $0x1b8] sm:$0xff]
    %v829 = vld [vmem:[#allocation2 + $0x1c0] sm:$0xff]
    %v830 = vld [vmem:[#allocation2 + $0x1c8] sm:$0xff]
    %v831 = vld [vmem:[#allocation2 + $0x1d0] sm:$0xff]
    %v832 = vld [vmem:[#allocation2 + $0x1d8] sm:$0x1]
    %v833 = vperm.slane %v832, 0
    %vm834 = vcmask 523264
    %v836 = vsel %vm834, %v820, 0
    %v839 = vsel %vm834, %v821, 0
    %v842 = vsel %vm834, %v822, 0
    %v845 = vsel %vm834, %v823, 0
    %847 = vmatpush.msra.mxu0 0.0
    %848 = vmatpush.msra.mxu0 0.0
    %849 = vmatpush.msra.mxu0 0.0
    %850 = vmatpush.msra.mxu0 0.0
    %851 = vmatpush.msra.mxu0 0.0
    %852 = vmatpush.msra.mxu0 0.0
    %853 = vmatpush.msra.mxu0 0.0
    %854 = vmatpush.msra.mxu0 0.0
    %855 = vmatpush.msra.mxu0 %v831
    %856 = vmatpush.msra.mxu0 %v830
    %857 = vmatpush.msra.mxu0 %v829
    %858 = vmatpush.msra.mxu0 %v828
    %859 = vmatpush.msra.mxu0 %v827
    %860 = vmatpush.msra.mxu0 %v826
    %861 = vmatpush.msra.mxu0 %v825
    %862 = vmatpush.msra.mxu0 %v824
    %863 = vmatmul.f32.gmra.mxu0 %v836
    %v864 = vpop.f32.mrf.mxu0
    %v865 = vadd.f32 %v833, %v864
    %866 = vmatmul.f32.gmra.mxu0 %v839
    %v867 = vpop.f32.mrf.mxu0
    %v868 = vadd.f32 %v833, %v867
    %869 = vmatmul.f32.gmra.mxu0 %v842
    %v870 = vpop.f32.mrf.mxu0
    %v871 = vadd.f32 %v833, %v870
    %872 = vmatmul.f32.gmra.mxu0 %v845
    %v873 = vpop.f32.mrf.mxu0
    %v874 = vadd.f32 %v833, %v873
    %875 = vdwg.mxu0
    %v876 = vadd.f32 %v769, %v865
    %v877 = vadd.f32 %v770, %v868
    %v878 = vadd.f32 %v771, %v871
    %v879 = vadd.f32 %v772, %v874
    %v880 = vld [vmem:[#allocation2 + $0x1e0] sm:$0x1]
    %v881 = vld [vmem:[#allocation2 + $0x1e8] sm:$0x1]
    %v882 = vsel %vm76, %v876, 0.0
    %883 = vadd.xlane.f32.xlu0 %v882
    %v884 = vpop.xlane.xlu0 %883
    %v885 = vsel %vm76, %v877, 0.0
    %886 = vadd.xlane.f32.xlu0 %v885
    %v887 = vpop.xlane.xlu0 %886
    %v888 = vsel %vm76, %v878, 0.0
    %889 = vadd.xlane.f32.xlu0 %v888
    %v890 = vpop.xlane.xlu0 %889
    %v891 = vsel %vm76, %v879, 0.0
    %892 = vadd.xlane.f32.xlu0 %v891
    %v893 = vpop.xlane.xlu0 %892
    %v894 = vmul.f32 %v884, %v686
    %v895 = vmul.f32 %v887, %v686
    %v896 = vmul.f32 %v890, %v686
    %v897 = vmul.f32 %v893, %v686
    %v898 = vsub.f32 %v876, %v894
    %v899 = vsub.f32 %v877, %v895
    %v900 = vsub.f32 %v878, %v896
    %v901 = vsub.f32 %v879, %v897
    %v902 = vmul.f32 %v898, %v898
    %v903 = vmul.f32 %v899, %v899
    %v904 = vmul.f32 %v900, %v900
    %v905 = vmul.f32 %v901, %v901
    %v906 = vsel %vm76, %v902, 0.0
    %907 = vadd.xlane.f32.xlu0 %v906
    %v908 = vpop.xlane.xlu0 %907
    %v909 = vsel %vm76, %v903, 0.0
    %910 = vadd.xlane.f32.xlu0 %v909
    %v911 = vpop.xlane.xlu0 %910
    %v912 = vsel %vm76, %v904, 0.0
    %913 = vadd.xlane.f32.xlu0 %v912
    %v914 = vpop.xlane.xlu0 %913
    %v915 = vsel %vm76, %v905, 0.0
    %916 = vadd.xlane.f32.xlu0 %v915
    %v917 = vpop.xlane.xlu0 %916
    %v918 = vmul.f32 %v908, %v686
    %v919 = vmul.f32 %v911, %v686
    %v920 = vmul.f32 %v914, %v686
    %v921 = vmul.f32 %v917, %v686
    %v922 = vadd.f32 %v918, 1e-05
    %v923 = vadd.f32 %v919, 1e-05
    %v924 = vadd.f32 %v920, 1e-05
    %v925 = vadd.f32 %v921, 1e-05
    %v926 = vrsqrt.pop %v922
    %v927 = vmul.f32 %v926, %v922
    %v928 = vmul.f32 %v927, %v926
    %v929 = vmul.f32 0.5, %v928
    %v930 = vsub.f32 1.5, %v929
    %v931 = vmul.f32 %v926, %v930
    %vm932 = vweird.f32 %v922
    %vm933 = vweird.f32 %v926
    %vm934 = vmor %vm932, %vm933
    %v935 = vsel %vm934, %v926, %v931
    %v936 = vrsqrt.pop %v923
    %v937 = vmul.f32 %v936, %v923
    %v938 = vmul.f32 %v937, %v936
    %v939 = vmul.f32 0.5, %v938
    %v940 = vsub.f32 1.5, %v939
    %v941 = vmul.f32 %v936, %v940
    %vm942 = vweird.f32 %v923
    %vm943 = vweird.f32 %v936
    %vm944 = vmor %vm942, %vm943
    %v945 = vsel %vm944, %v936, %v941
    %v946 = vrsqrt.pop %v924
    %v947 = vmul.f32 %v946, %v924
    %v948 = vmul.f32 %v947, %v946
    %v949 = vmul.f32 0.5, %v948
    %v950 = vsub.f32 1.5, %v949
    %v951 = vmul.f32 %v946, %v950
    %vm952 = vweird.f32 %v924
    %vm953 = vweird.f32 %v946
    %vm954 = vmor %vm952, %vm953
    %v955 = vsel %vm954, %v946, %v951
    %v956 = vrsqrt.pop %v925
    %v957 = vmul.f32 %v956, %v925
    %v958 = vmul.f32 %v957, %v956
    %v959 = vmul.f32 0.5, %v958
    %v960 = vsub.f32 1.5, %v959
    %v961 = vmul.f32 %v956, %v960
    %vm962 = vweird.f32 %v925
    %vm963 = vweird.f32 %v956
    %vm964 = vmor %vm962, %vm963
    %v965 = vsel %vm964, %v956, %v961
    %v966 = vmul.f32 %v898, %v935
    %v967 = vmul.f32 %v899, %v945
    %v968 = vmul.f32 %v900, %v955
    %v969 = vmul.f32 %v901, %v965
    %v970 = vperm.slane %v880, 0
    %v971 = vmul.f32 %v966, %v970
    %v972 = vmul.f32 %v967, %v970
    %v973 = vmul.f32 %v968, %v970
    %v974 = vmul.f32 %v969, %v970
    %v975 = vperm.slane %v881, 0
    %v976 = vadd.f32 %v971, %v975
    %v977 = vadd.f32 %v972, %v975
    %v978 = vadd.f32 %v973, %v975
    %v979 = vadd.f32 %v974, %v975
    %980 = vst.msk [vmem:[#allocation5] sm:$0xff] %vm76, %v976
    %981 = vst.msk [vmem:[#allocation5 + $0x8] sm:$0xff] %vm76, %v977
    %982 = vst.msk [vmem:[#allocation5 + $0x10] sm:$0xff] %vm76, %v978
    %983 = vst.msk [vmem:[#allocation5 + $0x18] sm:$0xff] %vm76, %v979
    // Predicated region
    $region14: #{tpu_custom_call.1} parent=1 // pred_check
      _
    $region15: #{tpu_custom_call.1} parent=1 // pred_check_branch
      %985 = sbr.rel (0) target = $region17
    $region16: #{tpu_custom_call.1} parent=1 // pred_region
      %987 = vsyncadd [#allocation4], 0
      %s988 = sshll.u32 [#allocation5], 4
      %s989 = int_to_ptr.vmem [resolvable:$true] %s988
      %s990 = sshll.u32 %s2, 4
      %s991 = int_to_ptr.hbm [resolvable:$true] %s990
      %996 = dma.vmem_to_hbm [thread:$0]  %s989, 512, %s991, [#allocation4], 128, 128, 8
    $region17: #{tpu_custom_call.1} parent=1 // pred_fallthru
      _
    // Predicated region
    $region18: #{tpu_custom_call.1} parent=1 // pred_check
      _
    $region19: #{tpu_custom_call.1} parent=1 // pred_check_branch
      %998 = sbr.rel (0) target = $region21
    $region20: #{tpu_custom_call.1} parent=1 // pred_region
      %1000 = dma.done [#allocation4], 512
    $region21: #{tpu_custom_call.1} parent=1 // pred_fallthru
      _
    %1001 = vsyncpa [#allocation3], 1
    %1002 = vsyncpa [#allocation4], 1

</llo_original>
